<compile_context>
chip_gen: v5e
topology: v5e:2x2
jax: 0.10.0
libtpu: 0.0.40
codegen_flags: <defaults>
</compile_context>

<pallas_src>
import jax
import jax.numpy as jnp
from jax.experimental import pallas as pl
from jax.experimental.pallas import tpu as pltpu


def _rotary_kernel(pos_ref, theta_ref, cos_ref, sin_ref):
    # pos_ref:   [R, 1]   float32 positions (flattened batch*seq tile)
    # theta_ref: [1, d/2] float32 inverse frequencies (reused every step)
    # cos_ref:   [R, d]   output tile
    # sin_ref:   [R, d]   output tile
    pos = pos_ref[...]                      # [R, 1]
    theta = theta_ref[...]                  # [1, d2]
    angle = pos * theta                     # [R, d2] outer product via VPU broadcast
    c = jnp.cos(angle)
    s = jnp.sin(angle)
    # Single full-width (lane-dense) store per output; halves are identical.
    cos_ref[...] = jnp.concatenate([c, c], axis=-1)
    sin_ref[...] = jnp.concatenate([s, s], axis=-1)


def _round_up(x: int, m: int) -> int:
    return (x + m - 1) // m * m


def rotary_embedding(position_ids: jax.Array, base: float, d: int, *, tile_rows: int = 1024):
    """position_ids: [B, S] (int or float). Returns (cos, sin), each [B, S, d] float32."""
    assert d % 2 == 0, "d must be even"
    B, S = position_ids.shape
    d2 = d // 2
    rows = B * S

    # Parameter, built deterministically (matches nn.Parameter in __init__).
    theta = (1.0 / base ** (jnp.arange(0, d, 2, dtype=jnp.float32) / d)).reshape(1, d2)

    # Row tile: multiple of 8 (sublane), capped at tile_rows; pad rows to a multiple.
    tile_r = min(tile_rows, _round_up(rows, 8))
    rows_p = _round_up(rows, tile_r)

    pos = position_ids.astype(jnp.float32).reshape(rows, 1)
    if rows_p != rows:
        pos = jnp.pad(pos, ((0, rows_p - rows), (0, 0)))

    cos_flat, sin_flat = pl.pallas_call(
        _rotary_kernel,
        out_shape=(
            jax.ShapeDtypeStruct((rows_p, d), jnp.float32),
            jax.ShapeDtypeStruct((rows_p, d), jnp.float32),
        ),
        grid_spec=pltpu.PrefetchScalarGridSpec(
            num_scalar_prefetch=0,
            grid=(rows_p // tile_r,),
            in_specs=[
                pl.BlockSpec((tile_r, 1), lambda i: (i, 0)),   # positions: tiled over rows
                pl.BlockSpec((1, d2), lambda i: (0, 0)),       # theta: same tiny block every step
            ],
            out_specs=[
                pl.BlockSpec((tile_r, d), lambda i: (i, 0)),
                pl.BlockSpec((tile_r, d), lambda i: (i, 0)),
            ],
        ),
        compiler_params=pltpu.CompilerParams(
            dimension_semantics=("parallel",)),   # independent tiles -> megacore on v7x
    )(pos, theta)

    if rows_p != rows:
        cos_flat = cos_flat[:rows]
        sin_flat = sin_flat[:rows]
    return cos_flat.reshape(B, S, d), sin_flat.reshape(B, S, d)


def _reference(position_ids, base, d):
    theta = 1.0 / base ** (jnp.arange(0, d, 2, dtype=jnp.float32) / d)   # [d/2]
    angle = jnp.einsum('a,bc->bca', theta, position_ids.astype(jnp.float32))
    anglex2 = jnp.concatenate([angle, angle], axis=-1)
    return jnp.cos(anglex2), jnp.sin(anglex2)


if __name__ == "__main__":
    key = jax.random.PRNGKey(0)
    B, S, d = 2, 8, 64
    base = 10000.0
    position_ids = jax.random.randint(key, (B, S), 0, 512).astype(jnp.int32)

    cos, sin = rotary_embedding(position_ids, base, d)
    jax.block_until_ready((cos, sin))

    cos_ref, sin_ref = _reference(position_ids, base, d)
    assert cos.shape == (B, S, d) and sin.shape == (B, S, d)
    assert jnp.allclose(cos, cos_ref, atol=1e-5, rtol=1e-5)
    assert jnp.allclose(sin, sin_ref, atol=1e-5, rtol=1e-5)

    print("KERNEL_OK")
</pallas_src>

<mosaic_0001>
module attributes {stable_mosaic.version = 11 : i64} {
  func.func @_rotary_kernel(%arg0: i32, %arg1: memref<16x1xf32, #tpu.memory_space<vmem>>, %arg2: memref<1x32xf32, #tpu.memory_space<vmem>>, %arg3: memref<16x64xf32, #tpu.memory_space<vmem>>, %arg4: memref<16x64xf32, #tpu.memory_space<vmem>>) attributes {dimension_semantics = [#tpu.dimension_semantics<parallel>], iteration_bounds = array<i64: 1>, scalar_prefetch = 0 : i64, scratch_operands = 0 : i64, tpu.core_type = #tpu.core_type<tc>, window_params = [{transform_indices = @transform_0, window_bounds = array<i64: 16, 1>}, {pipeline_mode = #tpu.pipeline_mode<synchronous>, transform_indices = @transform_1, window_bounds = array<i64: 1, 32>}, {transform_indices = @transform_2, window_bounds = array<i64: 16, 64>}, {transform_indices = @transform_3, window_bounds = array<i64: 16, 64>}]} {
    %c0 = arith.constant 0 : index
    %c0_0 = arith.constant 0 : index
    %0 = vector.load %arg1[%c0, %c0_0] : memref<16x1xf32, #tpu.memory_space<vmem>>, vector<16x1xf32>
    %c0_1 = arith.constant 0 : index
    %c0_2 = arith.constant 0 : index
    %1 = vector.load %arg2[%c0_1, %c0_2] : memref<1x32xf32, #tpu.memory_space<vmem>>, vector<1x32xf32>
    %2 = vector.broadcast %0 : vector<16x1xf32> to vector<16x32xf32>
    %3 = vector.broadcast %1 : vector<1x32xf32> to vector<16x32xf32>
    %4 = arith.mulf %2, %3 : vector<16x32xf32>
    %5 = math.cos %4 : vector<16x32xf32>
    %6 = math.sin %4 : vector<16x32xf32>
    %7 = tpu.concatenate %5, %5 in 1 : vector<16x32xf32>, vector<16x32xf32> -> vector<16x64xf32>
    %c0_3 = arith.constant 0 : index
    %c0_4 = arith.constant 0 : index
    %8 = vector.load %arg3[%c0_3, %c0_4] : memref<16x64xf32, #tpu.memory_space<vmem>>, vector<16x64xf32>
    tpu.vector_store %arg3[%c0_3, %c0_4], %7 {strides = array<i32>} : memref<16x64xf32, #tpu.memory_space<vmem>>, vector<16x64xf32>,
    %9 = tpu.concatenate %6, %6 in 1 : vector<16x32xf32>, vector<16x32xf32> -> vector<16x64xf32>
    %c0_5 = arith.constant 0 : index
    %c0_6 = arith.constant 0 : index
    %10 = vector.load %arg4[%c0_5, %c0_6] : memref<16x64xf32, #tpu.memory_space<vmem>>, vector<16x64xf32>
    tpu.vector_store %arg4[%c0_5, %c0_6], %9 {strides = array<i32>} : memref<16x64xf32, #tpu.memory_space<vmem>>, vector<16x64xf32>,
    return
  }
  func.func @transform_0(%arg0: i32) -> (i32, i32) {
    %c0_i32 = arith.constant 0 : i32
    %c0_i32_0 = arith.constant 0 : i32
    return %arg0, %c0_i32 : i32, i32
  }
  func.func @transform_1(%arg0: i32) -> (i32, i32) {
    %c0_i32 = arith.constant 0 : i32
    %c0_i32_0 = arith.constant 0 : i32
    %c0_i32_1 = arith.constant 0 : i32
    return %c0_i32, %c0_i32_0 : i32, i32
  }
  func.func @transform_2(%arg0: i32) -> (i32, i32) {
    %c0_i32 = arith.constant 0 : i32
    %c0_i32_0 = arith.constant 0 : i32
    return %arg0, %c0_i32 : i32, i32
  }
  func.func @transform_3(%arg0: i32) -> (i32, i32) {
    %c0_i32 = arith.constant 0 : i32
    %c0_i32_0 = arith.constant 0 : i32
    return %arg0, %c0_i32 : i32, i32
  }
}

</mosaic_0001>

<llo_original>
// kernel: tpu_custom_call.1
$region0: #{tpu_custom_call.1}
  #allocation0 [shape = 'u32[]', space=smem, size = 0x4, offset = 0x4, fixed_abs, tag = 'smem constant byte address 0x4 - core index']
  #allocation1 [shape = 'u32[72,128]{1,0:T(1,128)}', space=vmem, size = 0x9000, scoped, tag = 'internal scratch']
  %s0 = inlined_call_operand.vmem [shape: f32[16,1], index: 0, kind: input, shape index: {}]
  %s1 = inlined_call_operand.vmem [shape: f32[1,32], index: 1, kind: input, shape index: {}]
  %s2 = inlined_call_operand.hbm [shape: f32[16,64], index: 2, kind: output, shape index: {0}]
  %s3 = inlined_call_operand.hbm [shape: f32[16,64], index: 3, kind: output, shape index: {1}]
  %4 = xla_tuple %s2, %s3
  %s5 = sld [smem:[#allocation0]]
  $region26: #{tpu_custom_call.1} parent=0
    _
  %s7 = ssub.s32 1, %s5
  %s8 = scalar_select 0, %s7, %s5
  $region1: #{tpu_custom_call.1} parent=0
    #allocation2 [shape = 'u8[8192]{0}', space=vmem, size = 0x2000, scoped, tag = 'output window, operand 0, single buffered']
    #allocation3 [shape = 's32[1]{0}', space=sflag, size = 0x4, scoped, tag = 'scoped memory for tpu_custom_call.1']
    #allocation4 [shape = 'u8[8192]{0}', space=vmem, size = 0x2000, scoped, tag = 'output window, operand 1, single buffered']
    #allocation5 [shape = 's32[1]{0}', space=sflag, size = 0x4, scoped, tag = 'scoped memory for tpu_custom_call.1']
    %9 = vsyncpa [#allocation3], 0
    %10 = vsyncpa [#allocation5], 0
    // Predicated region
    $region2: #{tpu_custom_call.1} parent=1 // pred_check
      _
    $region3: #{tpu_custom_call.1} parent=1 // pred_check_branch
      %12 = sbr.rel (0) target = $region5
    $region4: #{tpu_custom_call.1} parent=1 // pred_region
      _
    $region5: #{tpu_custom_call.1} parent=1 // pred_fallthru
      _
    // Predicated region
    $region6: #{tpu_custom_call.1} parent=1 // pred_check
      _
    $region7: #{tpu_custom_call.1} parent=1 // pred_check_branch
      %14 = sbr.rel (0) target = $region9
    $region8: #{tpu_custom_call.1} parent=1 // pred_region
      _
    $region9: #{tpu_custom_call.1} parent=1 // pred_fallthru
      _
    %v15 = vld [vmem:[%s0] sm:$0xff]
    %v16 = vld [vmem:[%s0 + $0x8] sm:$0xff]
    %v17 = vld [vmem:[%s1] sm:$0x1]
    %19 = vset.pattern.permute.xlu0 0
    %20 = vperm.xlu0 %19, %v15
    %v21 = vpop.permute.xlu0 %20
    %24 = vset.pattern.permute.xlu0 0
    %25 = vperm.xlu0 %24, %v16
    %v26 = vpop.permute.xlu0 %25
    %v29 = vperm.slane %v17, 0
    %v31 = vmul.f32 %v21, %v29
    %v32 = vmul.f32 %v26, %v29
    %v33 = vand.u32 2147483647, %v31
    %vm34 = vcmp.le.f32.partialorder %v33, 0.7853982
    %vm35 = vcmp.lt.s32.totalorder %v31, 0
    %v36 = vand.u32 %v31, 2139095040
    %v37 = vshrl.u32 %v36, 23
    %v38 = vsub.s32 %v37, 127
    %v39 = vand.u32 2147483647, %v31
    %v40 = vand.u32 %v39, 8388607
    %v41 = vor.u32 %v40, 8388608
    %v42 = vsub.s32 0, %v41
    %v43 = vadd.s32 %v38, 1
    %vm44 = vcmp.gt.s32.totalorder %v43, 0
    %v45 = vsel %vm44, %v43, 0
    %v46 = vshrl.u32 %v45, 5
    %v47 = vand.u32 %v45, 31
    %v48 = vsub.s32 32, %v47
    %v49 = vshrl.u32 683565275, %v48
    %v50 = vshll.u32 683565275, %v47
    %v51 = vshrl.u32 2475754826, %v48
    %v52 = vor.u32 %v50, %v51
    %v53 = vshll.u32 2475754826, %v47
    %v54 = vshrl.u32 2131351028, %v48
    %v55 = vor.u32 %v53, %v54
    %v56 = vshll.u32 2131351028, %v47
    %v57 = vshrl.u32 2102212464, %v48
    %v58 = vor.u32 %v56, %v57
    %v59 = vshll.u32 2102212464, %v47
    %v60 = vshrl.u32 920167782, %v48
    %v61 = vor.u32 %v59, %v60
    %v62 = vshll.u32 920167782, %v47
    %v63 = vshrl.u32 1326507024, %v48
    %v64 = vor.u32 %v62, %v63
    %vm65 = vcmp.lt.s32.totalorder %v46, 1
    %vm66 = vcmp.lt.s32.totalorder %v46, 2
    %vm67 = vcmp.lt.s32.totalorder %v46, 3
    %vm68 = vcmp.lt.s32.totalorder %v46, 4
    %v69 = vsel %vm65, %v49, %v52
    %v70 = vsel %vm68, %v58, 2102212464
    %v71 = vsel %vm67, %v55, %v70
    %v72 = vsel %vm66, %v69, %v71
    %v73 = vsel %vm65, %v52, %v55
    %v74 = vsel %vm68, %v61, 920167782
    %v75 = vsel %vm67, %v58, %v74
    %v76 = vsel %vm66, %v73, %v75
    %v77 = vsel %vm65, %v55, %v58
    %v78 = vsel %vm68, %v64, 1326507024
    %v79 = vsel %vm67, %v61, %v78
    %v80 = vsel %vm66, %v77, %v79
    %v81 = vshll.u32 %v41, 8
    %v82 = vand.u32 %v81, 65535
    %v83 = vshrl.u32 %v81, 16
    %v84 = vand.u32 %v80, 65535
    %v85 = vshrl.u32 %v80, 16
    %v86 = vmul.u32 %v82, %v84
    %v87 = vmul.u32 %v82, %v85
    %v88 = vmul.u32 %v83, %v84
    %v89 = vmul.u32 %v83, %v85
    %v90 = vshll.u32 %v87, 16
    %v91 = vshrl.u32 %v87, 16
    %v92 = vshll.u32 %v88, 16
    %v93 = vshrl.u32 %v88, 16
    %vm94 = vc.u32 %v86, %v90
    %v95 = vsel %vm94, 1, 0
    %v96 = vadd.s32 %v86, %v90
    %v97 = vadd.s32 %v89, %v95
    %vm98 = vc.u32 %v96, %v92
    %v99 = vsel %vm98, 1, 0
    %v100 = vadd.s32 %v96, %v92
    %v101 = vadd.s32 %v97, %v99
    %v102 = vadd.s32 %v101, %v91
    %v103 = vadd.s32 %v102, %v93
    %v104 = vand.u32 %v81, 65535
    %v105 = vshrl.u32 %v81, 16
    %v106 = vand.u32 %v76, 65535
    %v107 = vshrl.u32 %v76, 16
    %v108 = vmul.u32 %v104, %v106
    %v109 = vmul.u32 %v104, %v107
    %v110 = vmul.u32 %v105, %v106
    %v111 = vmul.u32 %v105, %v107
    %v112 = vshll.u32 %v109, 16
    %v113 = vshrl.u32 %v109, 16
    %v114 = vshll.u32 %v110, 16
    %v115 = vshrl.u32 %v110, 16
    %vm116 = vc.u32 %v108, %v112
    %v117 = vsel %vm116, 1, 0
    %v118 = vadd.s32 %v108, %v112
    %v119 = vadd.s32 %v111, %v117
    %vm120 = vc.u32 %v118, %v114
    %v121 = vsel %vm120, 1, 0
    %v122 = vadd.s32 %v118, %v114
    %v123 = vadd.s32 %v119, %v121
    %v124 = vadd.s32 %v123, %v113
    %v125 = vadd.s32 %v124, %v115
    %v126 = vmul.u32 %v81, %v72
    %v127 = vadd.s32 %v103, %v122
    %vm128 = vc.u32 %v103, %v122
    %v129 = vadd.s32 %v125, 1
    %v130 = vsel %vm128, %v129, %v125
    %v131 = vadd.s32 %v126, %v130
    %v132 = vadd.s32 %v131, 536870912
    %v133 = vshrl.u32 %v132, 30
    %v134 = vshll.u32 %v133, 30
    %v135 = vsub.s32 %v131, %v134
    %vm136 = vcmp.lt.s32.totalorder %v135, 0
    %v137 = vsub.s32 0, %v135
    %v138 = vsel %vm136, %v137, %v135
    %v139 = vclz %v138
    %v140 = vsub.s32 %v139, 2
    %vm141 = vcmp.gt.s32.totalorder 0, %v140
    %v142 = vsel %vm141, 0, %v140
    %v143 = vsub.s32 32, %v142
    %v144 = vshll.u32 %v135, %v142
    %v145 = vshrl.u32 %v127, %v143
    %v146 = vor.u32 %v144, %v145
    %v147 = vsub.s32 4294967266, %v142
    %v148 = vadd.s32 %v147, 127
    %v149 = vshll.u32 %v148, 23
    %v150 = vor.u32 4788187, %v149
    %v151 = vand.u32 2147483647, %v150
    %v153 = vcvt.s32.f32 %v146
    %v154 = vmul.f32 %v153, %v151
    %v155 = vxor.u32 %v154, 2147483648
    %v156 = vsel %vm35, %v155, %v154
    %v157 = vsub.s32 4, %v133
    %v158 = vsel %vm35, %v157, %v133
    %v159 = vsel %vm34, %v31, %v156
    %v160 = vsel %vm34, 0, %v158
    %v161 = vmul.f32 %v159, %v159
    %v162 = vmul.f32 %v161, -0.001358992
    %v163 = vadd.f32 %v162, 0.041655596
    %v164 = vmul.f32 %v161, %v163
    %v165 = vadd.f32 %v164, -0.4999988
    %v166 = vmul.f32 %v161, %v165
    %v167 = vadd.f32 1.0, %v166
    %v168 = vmul.f32 %v159, %v159
    %v169 = vmul.f32 %v168, -0.00019511016
    %v170 = vadd.f32 %v169, 0.008332121
    %v171 = vmul.f32 %v168, %v170
    %v172 = vadd.f32 %v171, -0.16666654
    %v173 = vmul.f32 %v168, %v172
    %v174 = vadd.f32 %v173, 1.0
    %v175 = vmul.f32 %v174, %v159
    %vm176 = vweird.f32 %v31
    %v177 = vand.u32 %v160, 3
    %vm178 = vcmp.lt.s32.totalorder %v177, 2
    %vm179 = vcmp.eq.s32.totalorder %v177, 0
    %v180 = vxor.u32 %v175, 2147483648
    %v181 = vsel %vm179, %v167, %v180
    %vm182 = vcmp.eq.s32.totalorder %v177, 2
    %v183 = vxor.u32 %v167, 2147483648
    %v184 = vsel %vm182, %v183, %v175
    %v185 = vsel %vm178, %v181, %v184
    %v186 = vsel %vm176, nan, %v185
    %v187 = vand.u32 2147483647, %v32
    %vm188 = vcmp.le.f32.partialorder %v187, 0.7853982
    %vm189 = vcmp.lt.s32.totalorder %v32, 0
    %v190 = vand.u32 %v32, 2139095040
    %v191 = vshrl.u32 %v190, 23
    %v192 = vsub.s32 %v191, 127
    %v193 = vand.u32 2147483647, %v32
    %v194 = vand.u32 %v193, 8388607
    %v195 = vor.u32 %v194, 8388608
    %v196 = vsub.s32 0, %v195
    %v197 = vadd.s32 %v192, 1
    %vm198 = vcmp.gt.s32.totalorder %v197, 0
    %v199 = vsel %vm198, %v197, 0
    %v200 = vshrl.u32 %v199, 5
    %v201 = vand.u32 %v199, 31
    %v202 = vsub.s32 32, %v201
    %v203 = vshrl.u32 683565275, %v202
    %v204 = vshll.u32 683565275, %v201
    %v205 = vshrl.u32 2475754826, %v202
    %v206 = vor.u32 %v204, %v205
    %v207 = vshll.u32 2475754826, %v201
    %v208 = vshrl.u32 2131351028, %v202
    %v209 = vor.u32 %v207, %v208
    %v210 = vshll.u32 2131351028, %v201
    %v211 = vshrl.u32 2102212464, %v202
    %v212 = vor.u32 %v210, %v211
    %v213 = vshll.u32 2102212464, %v201
    %v214 = vshrl.u32 920167782, %v202
    %v215 = vor.u32 %v213, %v214
    %v216 = vshll.u32 920167782, %v201
    %v217 = vshrl.u32 1326507024, %v202
    %v218 = vor.u32 %v216, %v217
    %vm219 = vcmp.lt.s32.totalorder %v200, 1
    %vm220 = vcmp.lt.s32.totalorder %v200, 2
    %vm221 = vcmp.lt.s32.totalorder %v200, 3
    %vm222 = vcmp.lt.s32.totalorder %v200, 4
    %v223 = vsel %vm219, %v203, %v206
    %v224 = vsel %vm222, %v212, 2102212464
    %v225 = vsel %vm221, %v209, %v224
    %v226 = vsel %vm220, %v223, %v225
    %v227 = vsel %vm219, %v206, %v209
    %v228 = vsel %vm222, %v215, 920167782
    %v229 = vsel %vm221, %v212, %v228
    %v230 = vsel %vm220, %v227, %v229
    %v231 = vsel %vm219, %v209, %v212
    %v232 = vsel %vm222, %v218, 1326507024
    %v233 = vsel %vm221, %v215, %v232
    %v234 = vsel %vm220, %v231, %v233
    %v235 = vshll.u32 %v195, 8
    %v236 = vand.u32 %v235, 65535
    %v237 = vshrl.u32 %v235, 16
    %v238 = vand.u32 %v234, 65535
    %v239 = vshrl.u32 %v234, 16
    %v240 = vmul.u32 %v236, %v238
    %v241 = vmul.u32 %v236, %v239
    %v242 = vmul.u32 %v237, %v238
    %v243 = vmul.u32 %v237, %v239
    %v244 = vshll.u32 %v241, 16
    %v245 = vshrl.u32 %v241, 16
    %v246 = vshll.u32 %v242, 16
    %v247 = vshrl.u32 %v242, 16
    %vm248 = vc.u32 %v240, %v244
    %v249 = vsel %vm248, 1, 0
    %v250 = vadd.s32 %v240, %v244
    %v251 = vadd.s32 %v243, %v249
    %vm252 = vc.u32 %v250, %v246
    %v253 = vsel %vm252, 1, 0
    %v254 = vadd.s32 %v250, %v246
    %v255 = vadd.s32 %v251, %v253
    %v256 = vadd.s32 %v255, %v245
    %v257 = vadd.s32 %v256, %v247
    %v258 = vand.u32 %v235, 65535
    %v259 = vshrl.u32 %v235, 16
    %v260 = vand.u32 %v230, 65535
    %v261 = vshrl.u32 %v230, 16
    %v262 = vmul.u32 %v258, %v260
    %v263 = vmul.u32 %v258, %v261
    %v264 = vmul.u32 %v259, %v260
    %v265 = vmul.u32 %v259, %v261
    %v266 = vshll.u32 %v263, 16
    %v267 = vshrl.u32 %v263, 16
    %v268 = vshll.u32 %v264, 16
    %v269 = vshrl.u32 %v264, 16
    %vm270 = vc.u32 %v262, %v266
    %v271 = vsel %vm270, 1, 0
    %v272 = vadd.s32 %v262, %v266
    %v273 = vadd.s32 %v265, %v271
    %vm274 = vc.u32 %v272, %v268
    %v275 = vsel %vm274, 1, 0
    %v276 = vadd.s32 %v272, %v268
    %v277 = vadd.s32 %v273, %v275
    %v278 = vadd.s32 %v277, %v267
    %v279 = vadd.s32 %v278, %v269
    %v280 = vmul.u32 %v235, %v226
    %v281 = vadd.s32 %v257, %v276
    %vm282 = vc.u32 %v257, %v276
    %v283 = vadd.s32 %v279, 1
    %v284 = vsel %vm282, %v283, %v279
    %v285 = vadd.s32 %v280, %v284
    %v286 = vadd.s32 %v285, 536870912
    %v287 = vshrl.u32 %v286, 30
    %v288 = vshll.u32 %v287, 30
    %v289 = vsub.s32 %v285, %v288
    %vm290 = vcmp.lt.s32.totalorder %v289, 0
    %v291 = vsub.s32 0, %v289
    %v292 = vsel %vm290, %v291, %v289
    %v293 = vclz %v292
    %v294 = vsub.s32 %v293, 2
    %vm295 = vcmp.gt.s32.totalorder 0, %v294
    %v296 = vsel %vm295, 0, %v294
    %v297 = vsub.s32 32, %v296
    %v298 = vshll.u32 %v289, %v296
    %v299 = vshrl.u32 %v281, %v297
    %v300 = vor.u32 %v298, %v299
    %v301 = vsub.s32 4294967266, %v296
    %v302 = vadd.s32 %v301, 127
    %v303 = vshll.u32 %v302, 23
    %v304 = vor.u32 4788187, %v303
    %v305 = vand.u32 2147483647, %v304
    %v307 = vcvt.s32.f32 %v300
    %v308 = vmul.f32 %v307, %v305
    %v309 = vxor.u32 %v308, 2147483648
    %v310 = vsel %vm189, %v309, %v308
    %v311 = vsub.s32 4, %v287
    %v312 = vsel %vm189, %v311, %v287
    %v313 = vsel %vm188, %v32, %v310
    %v314 = vsel %vm188, 0, %v312
    %v315 = vmul.f32 %v313, %v313
    %v316 = vmul.f32 %v315, -0.001358992
    %v317 = vadd.f32 %v316, 0.041655596
    %v318 = vmul.f32 %v315, %v317
    %v319 = vadd.f32 %v318, -0.4999988
    %v320 = vmul.f32 %v315, %v319
    %v321 = vadd.f32 1.0, %v320
    %v322 = vmul.f32 %v313, %v313
    %v323 = vmul.f32 %v322, -0.00019511016
    %v324 = vadd.f32 %v323, 0.008332121
    %v325 = vmul.f32 %v322, %v324
    %v326 = vadd.f32 %v325, -0.16666654
    %v327 = vmul.f32 %v322, %v326
    %v328 = vadd.f32 %v327, 1.0
    %v329 = vmul.f32 %v328, %v313
    %vm330 = vweird.f32 %v32
    %v331 = vand.u32 %v314, 3
    %vm332 = vcmp.lt.s32.totalorder %v331, 2
    %vm333 = vcmp.eq.s32.totalorder %v331, 0
    %v334 = vxor.u32 %v329, 2147483648
    %v335 = vsel %vm333, %v321, %v334
    %vm336 = vcmp.eq.s32.totalorder %v331, 2
    %v337 = vxor.u32 %v321, 2147483648
    %v338 = vsel %vm336, %v337, %v329
    %v339 = vsel %vm332, %v335, %v338
    %v340 = vsel %vm330, nan, %v339
    %v341 = vand.u32 2147483647, %v31
    %vm342 = vcmp.le.f32.partialorder %v341, 0.7853982
    %vm343 = vcmp.lt.s32.totalorder %v31, 0
    %v344 = vand.u32 %v31, 2139095040
    %v345 = vshrl.u32 %v344, 23
    %v346 = vsub.s32 %v345, 127
    %v347 = vand.u32 2147483647, %v31
    %v348 = vand.u32 %v347, 8388607
    %v349 = vor.u32 %v348, 8388608
    %v350 = vsub.s32 0, %v349
    %v351 = vadd.s32 %v346, 1
    %vm352 = vcmp.gt.s32.totalorder %v351, 0
    %v353 = vsel %vm352, %v351, 0
    %v354 = vshrl.u32 %v353, 5
    %v355 = vand.u32 %v353, 31
    %v356 = vsub.s32 32, %v355
    %v357 = vshrl.u32 683565275, %v356
    %v358 = vshll.u32 683565275, %v355
    %v359 = vshrl.u32 2475754826, %v356
    %v360 = vor.u32 %v358, %v359
    %v361 = vshll.u32 2475754826, %v355
    %v362 = vshrl.u32 2131351028, %v356
    %v363 = vor.u32 %v361, %v362
    %v364 = vshll.u32 2131351028, %v355
    %v365 = vshrl.u32 2102212464, %v356
    %v366 = vor.u32 %v364, %v365
    %v367 = vshll.u32 2102212464, %v355
    %v368 = vshrl.u32 920167782, %v356
    %v369 = vor.u32 %v367, %v368
    %v370 = vshll.u32 920167782, %v355
    %v371 = vshrl.u32 1326507024, %v356
    %v372 = vor.u32 %v370, %v371
    %vm373 = vcmp.lt.s32.totalorder %v354, 1
    %vm374 = vcmp.lt.s32.totalorder %v354, 2
    %vm375 = vcmp.lt.s32.totalorder %v354, 3
    %vm376 = vcmp.lt.s32.totalorder %v354, 4
    %v377 = vsel %vm373, %v357, %v360
    %v378 = vsel %vm376, %v366, 2102212464
    %v379 = vsel %vm375, %v363, %v378
    %v380 = vsel %vm374, %v377, %v379
    %v381 = vsel %vm373, %v360, %v363
    %v382 = vsel %vm376, %v369, 920167782
    %v383 = vsel %vm375, %v366, %v382
    %v384 = vsel %vm374, %v381, %v383
    %v385 = vsel %vm373, %v363, %v366
    %v386 = vsel %vm376, %v372, 1326507024
    %v387 = vsel %vm375, %v369, %v386
    %v388 = vsel %vm374, %v385, %v387
    %v389 = vshll.u32 %v349, 8
    %v390 = vand.u32 %v389, 65535
    %v391 = vshrl.u32 %v389, 16
    %v392 = vand.u32 %v388, 65535
    %v393 = vshrl.u32 %v388, 16
    %v394 = vmul.u32 %v390, %v392
    %v395 = vmul.u32 %v390, %v393
    %v396 = vmul.u32 %v391, %v392
    %v397 = vmul.u32 %v391, %v393
    %v398 = vshll.u32 %v395, 16
    %v399 = vshrl.u32 %v395, 16
    %v400 = vshll.u32 %v396, 16
    %v401 = vshrl.u32 %v396, 16
    %vm402 = vc.u32 %v394, %v398
    %v403 = vsel %vm402, 1, 0
    %v404 = vadd.s32 %v394, %v398
    %v405 = vadd.s32 %v397, %v403
    %vm406 = vc.u32 %v404, %v400
    %v407 = vsel %vm406, 1, 0
    %v408 = vadd.s32 %v404, %v400
    %v409 = vadd.s32 %v405, %v407
    %v410 = vadd.s32 %v409, %v399
    %v411 = vadd.s32 %v410, %v401
    %v412 = vand.u32 %v389, 65535
    %v413 = vshrl.u32 %v389, 16
    %v414 = vand.u32 %v384, 65535
    %v415 = vshrl.u32 %v384, 16
    %v416 = vmul.u32 %v412, %v414
    %v417 = vmul.u32 %v412, %v415
    %v418 = vmul.u32 %v413, %v414
    %v419 = vmul.u32 %v413, %v415
    %v420 = vshll.u32 %v417, 16
    %v421 = vshrl.u32 %v417, 16
    %v422 = vshll.u32 %v418, 16
    %v423 = vshrl.u32 %v418, 16
    %vm424 = vc.u32 %v416, %v420
    %v425 = vsel %vm424, 1, 0
    %v426 = vadd.s32 %v416, %v420
    %v427 = vadd.s32 %v419, %v425
    %vm428 = vc.u32 %v426, %v422
    %v429 = vsel %vm428, 1, 0
    %v430 = vadd.s32 %v426, %v422
    %v431 = vadd.s32 %v427, %v429
    %v432 = vadd.s32 %v431, %v421
    %v433 = vadd.s32 %v432, %v423
    %v434 = vmul.u32 %v389, %v380
    %v435 = vadd.s32 %v411, %v430
    %vm436 = vc.u32 %v411, %v430
    %v437 = vadd.s32 %v433, 1
    %v438 = vsel %vm436, %v437, %v433
    %v439 = vadd.s32 %v434, %v438
    %v440 = vadd.s32 %v439, 536870912
    %v441 = vshrl.u32 %v440, 30
    %v442 = vshll.u32 %v441, 30
    %v443 = vsub.s32 %v439, %v442
    %vm444 = vcmp.lt.s32.totalorder %v443, 0
    %v445 = vsub.s32 0, %v443
    %v446 = vsel %vm444, %v445, %v443
    %v447 = vclz %v446
    %v448 = vsub.s32 %v447, 2
    %vm449 = vcmp.gt.s32.totalorder 0, %v448
    %v450 = vsel %vm449, 0, %v448
    %v451 = vsub.s32 32, %v450
    %v452 = vshll.u32 %v443, %v450
    %v453 = vshrl.u32 %v435, %v451
    %v454 = vor.u32 %v452, %v453
    %v455 = vsub.s32 4294967266, %v450
    %v456 = vadd.s32 %v455, 127
    %v457 = vshll.u32 %v456, 23
    %v458 = vor.u32 4788187, %v457
    %v459 = vand.u32 2147483647, %v458
    %v461 = vcvt.s32.f32 %v454
    %v462 = vmul.f32 %v461, %v459
    %v463 = vxor.u32 %v462, 2147483648
    %v464 = vsel %vm343, %v463, %v462
    %v465 = vsub.s32 4, %v441
    %v466 = vsel %vm343, %v465, %v441
    %v467 = vsel %vm342, %v31, %v464
    %v468 = vsel %vm342, 0, %v466
    %v469 = vmul.f32 %v467, %v467
    %v470 = vmul.f32 %v469, -0.001358992
    %v471 = vadd.f32 %v470, 0.041655596
    %v472 = vmul.f32 %v469, %v471
    %v473 = vadd.f32 %v472, -0.4999988
    %v474 = vmul.f32 %v469, %v473
    %v475 = vadd.f32 1.0, %v474
    %v476 = vmul.f32 %v467, %v467
    %v477 = vmul.f32 %v476, -0.00019511016
    %v478 = vadd.f32 %v477, 0.008332121
    %v479 = vmul.f32 %v476, %v478
    %v480 = vadd.f32 %v479, -0.16666654
    %v481 = vmul.f32 %v476, %v480
    %v482 = vadd.f32 %v481, 1.0
    %v483 = vmul.f32 %v482, %v467
    %vm484 = vweird.f32 %v31
    %v485 = vadd.s32 %v468, 3
    %v486 = vand.u32 %v485, 3
    %vm487 = vcmp.lt.s32.totalorder %v486, 2
    %vm488 = vcmp.eq.s32.totalorder %v486, 0
    %v489 = vxor.u32 %v483, 2147483648
    %v490 = vsel %vm488, %v475, %v489
    %vm491 = vcmp.eq.s32.totalorder %v486, 2
    %v492 = vxor.u32 %v475, 2147483648
    %v493 = vsel %vm491, %v492, %v483
    %v494 = vsel %vm487, %v490, %v493
    %v495 = vsel %vm484, nan, %v494
    %v496 = vand.u32 2147483647, %v32
    %vm497 = vcmp.le.f32.partialorder %v496, 0.7853982
    %vm498 = vcmp.lt.s32.totalorder %v32, 0
    %v499 = vand.u32 %v32, 2139095040
    %v500 = vshrl.u32 %v499, 23
    %v501 = vsub.s32 %v500, 127
    %v502 = vand.u32 2147483647, %v32
    %v503 = vand.u32 %v502, 8388607
    %v504 = vor.u32 %v503, 8388608
    %v505 = vsub.s32 0, %v504
    %v506 = vadd.s32 %v501, 1
    %vm507 = vcmp.gt.s32.totalorder %v506, 0
    %v508 = vsel %vm507, %v506, 0
    %v509 = vshrl.u32 %v508, 5
    %v510 = vand.u32 %v508, 31
    %v511 = vsub.s32 32, %v510
    %v512 = vshrl.u32 683565275, %v511
    %v513 = vshll.u32 683565275, %v510
    %v514 = vshrl.u32 2475754826, %v511
    %v515 = vor.u32 %v513, %v514
    %v516 = vshll.u32 2475754826, %v510
    %v517 = vshrl.u32 2131351028, %v511
    %v518 = vor.u32 %v516, %v517
    %v519 = vshll.u32 2131351028, %v510
    %v520 = vshrl.u32 2102212464, %v511
    %v521 = vor.u32 %v519, %v520
    %v522 = vshll.u32 2102212464, %v510
    %v523 = vshrl.u32 920167782, %v511
    %v524 = vor.u32 %v522, %v523
    %v525 = vshll.u32 920167782, %v510
    %v526 = vshrl.u32 1326507024, %v511
    %v527 = vor.u32 %v525, %v526
    %vm528 = vcmp.lt.s32.totalorder %v509, 1
    %vm529 = vcmp.lt.s32.totalorder %v509, 2
    %vm530 = vcmp.lt.s32.totalorder %v509, 3
    %vm531 = vcmp.lt.s32.totalorder %v509, 4
    %v532 = vsel %vm528, %v512, %v515
    %v533 = vsel %vm531, %v521, 2102212464
    %v534 = vsel %vm530, %v518, %v533
    %v535 = vsel %vm529, %v532, %v534
    %v536 = vsel %vm528, %v515, %v518
    %v537 = vsel %vm531, %v524, 920167782
    %v538 = vsel %vm530, %v521, %v537
    %v539 = vsel %vm529, %v536, %v538
    %v540 = vsel %vm528, %v518, %v521
    %v541 = vsel %vm531, %v527, 1326507024
    %v542 = vsel %vm530, %v524, %v541
    %v543 = vsel %vm529, %v540, %v542
    %v544 = vshll.u32 %v504, 8
    %v545 = vand.u32 %v544, 65535
    %v546 = vshrl.u32 %v544, 16
    %v547 = vand.u32 %v543, 65535
    %v548 = vshrl.u32 %v543, 16
    %v549 = vmul.u32 %v545, %v547
    %v550 = vmul.u32 %v545, %v548
    %v551 = vmul.u32 %v546, %v547
    %v552 = vmul.u32 %v546, %v548
    %v553 = vshll.u32 %v550, 16
    %v554 = vshrl.u32 %v550, 16
    %v555 = vshll.u32 %v551, 16
    %v556 = vshrl.u32 %v551, 16
    %vm557 = vc.u32 %v549, %v553
    %v558 = vsel %vm557, 1, 0
    %v559 = vadd.s32 %v549, %v553
    %v560 = vadd.s32 %v552, %v558
    %vm561 = vc.u32 %v559, %v555
    %v562 = vsel %vm561, 1, 0
    %v563 = vadd.s32 %v559, %v555
    %v564 = vadd.s32 %v560, %v562
    %v565 = vadd.s32 %v564, %v554
    %v566 = vadd.s32 %v565, %v556
    %v567 = vand.u32 %v544, 65535
    %v568 = vshrl.u32 %v544, 16
    %v569 = vand.u32 %v539, 65535
    %v570 = vshrl.u32 %v539, 16
    %v571 = vmul.u32 %v567, %v569
    %v572 = vmul.u32 %v567, %v570
    %v573 = vmul.u32 %v568, %v569
    %v574 = vmul.u32 %v568, %v570
    %v575 = vshll.u32 %v572, 16
    %v576 = vshrl.u32 %v572, 16
    %v577 = vshll.u32 %v573, 16
    %v578 = vshrl.u32 %v573, 16
    %vm579 = vc.u32 %v571, %v575
    %v580 = vsel %vm579, 1, 0
    %v581 = vadd.s32 %v571, %v575
    %v582 = vadd.s32 %v574, %v580
    %vm583 = vc.u32 %v581, %v577
    %v584 = vsel %vm583, 1, 0
    %v585 = vadd.s32 %v581, %v577
    %v586 = vadd.s32 %v582, %v584
    %v587 = vadd.s32 %v586, %v576
    %v588 = vadd.s32 %v587, %v578
    %v589 = vmul.u32 %v544, %v535
    %v590 = vadd.s32 %v566, %v585
    %vm591 = vc.u32 %v566, %v585
    %v592 = vadd.s32 %v588, 1
    %v593 = vsel %vm591, %v592, %v588
    %v594 = vadd.s32 %v589, %v593
    %v595 = vadd.s32 %v594, 536870912
    %v596 = vshrl.u32 %v595, 30
    %v597 = vshll.u32 %v596, 30
    %v598 = vsub.s32 %v594, %v597
    %vm599 = vcmp.lt.s32.totalorder %v598, 0
    %v600 = vsub.s32 0, %v598
    %v601 = vsel %vm599, %v600, %v598
    %v602 = vclz %v601
    %v603 = vsub.s32 %v602, 2
    %vm604 = vcmp.gt.s32.totalorder 0, %v603
    %v605 = vsel %vm604, 0, %v603
    %v606 = vsub.s32 32, %v605
    %v607 = vshll.u32 %v598, %v605
    %v608 = vshrl.u32 %v590, %v606
    %v609 = vor.u32 %v607, %v608
    %v610 = vsub.s32 4294967266, %v605
    %v611 = vadd.s32 %v610, 127
    %v612 = vshll.u32 %v611, 23
    %v613 = vor.u32 4788187, %v612
    %v614 = vand.u32 2147483647, %v613
    %v616 = vcvt.s32.f32 %v609
    %v617 = vmul.f32 %v616, %v614
    %v618 = vxor.u32 %v617, 2147483648
    %v619 = vsel %vm498, %v618, %v617
    %v620 = vsub.s32 4, %v596
    %v621 = vsel %vm498, %v620, %v596
    %v622 = vsel %vm497, %v32, %v619
    %v623 = vsel %vm497, 0, %v621
    %v624 = vmul.f32 %v622, %v622
    %v625 = vmul.f32 %v624, -0.001358992
    %v626 = vadd.f32 %v625, 0.041655596
    %v627 = vmul.f32 %v624, %v626
    %v628 = vadd.f32 %v627, -0.4999988
    %v629 = vmul.f32 %v624, %v628
    %v630 = vadd.f32 1.0, %v629
    %v631 = vmul.f32 %v622, %v622
    %v632 = vmul.f32 %v631, -0.00019511016
    %v633 = vadd.f32 %v632, 0.008332121
    %v634 = vmul.f32 %v631, %v633
    %v635 = vadd.f32 %v634, -0.16666654
    %v636 = vmul.f32 %v631, %v635
    %v637 = vadd.f32 %v636, 1.0
    %v638 = vmul.f32 %v637, %v622
    %vm639 = vweird.f32 %v32
    %v640 = vadd.s32 %v623, 3
    %v641 = vand.u32 %v640, 3
    %vm642 = vcmp.lt.s32.totalorder %v641, 2
    %vm643 = vcmp.eq.s32.totalorder %v641, 0
    %v644 = vxor.u32 %v638, 2147483648
    %v645 = vsel %vm643, %v630, %v644
    %vm646 = vcmp.eq.s32.totalorder %v641, 2
    %v647 = vxor.u32 %v630, 2147483648
    %v648 = vsel %vm646, %v647, %v638
    %v649 = vsel %vm642, %v645, %v648
    %v650 = vsel %vm639, nan, %v649
    %653 = vrot.lane.b32.xlu0 %v186, 32
    %v654 = vpop.permute.xlu0 %653
    %655 = vrot.lane.b32.xlu0 %v340, 32
    %v656 = vpop.permute.xlu0 %655
    %vm659 = vcmask 261120
    %v660 = vsel %vm659, %v186, %v654
    %v661 = vsel %vm659, %v340, %v656
    %vm662 = vcmask 523264
    %663 = vst.msk [vmem:[#allocation2] sm:$0xff] %vm662, %v660
    %664 = vst.msk [vmem:[#allocation2 + $0x8] sm:$0xff] %vm662, %v661
    %667 = vrot.lane.b32.xlu0 %v495, 32
    %v668 = vpop.permute.xlu0 %667
    %669 = vrot.lane.b32.xlu0 %v650, 32
    %v670 = vpop.permute.xlu0 %669
    %v673 = vsel %vm659, %v495, %v668
    %v674 = vsel %vm659, %v650, %v670
    %675 = vst.msk [vmem:[#allocation4] sm:$0xff] %vm662, %v673
    %676 = vst.msk [vmem:[#allocation4 + $0x8] sm:$0xff] %vm662, %v674
    // Predicated region
    $region10: #{tpu_custom_call.1} parent=1 // pred_check
      _
    $region11: #{tpu_custom_call.1} parent=1 // pred_check_branch
      %678 = sbr.rel (0) target = $region13
    $region12: #{tpu_custom_call.1} parent=1 // pred_region
      %680 = vsyncadd [#allocation3], 0
      %s681 = sshll.u32 [#allocation2], 4
      %s682 = int_to_ptr.vmem [resolvable:$true] %s681
      %s683 = sshll.u32 %s2, 4
      %s684 = int_to_ptr.hbm [resolvable:$true] %s683
      %689 = dma.vmem_to_hbm [thread:$0]  %s682, 256, %s684, [#allocation3], 128, 128, 8
    $region13: #{tpu_custom_call.1} parent=1 // pred_fallthru
      _
    // Predicated region
    $region14: #{tpu_custom_call.1} parent=1 // pred_check
      _
    $region15: #{tpu_custom_call.1} parent=1 // pred_check_branch
      %691 = sbr.rel (0) target = $region17
    $region16: #{tpu_custom_call.1} parent=1 // pred_region
      %693 = vsyncadd [#allocation5], 0
      %s694 = sshll.u32 [#allocation4], 4
      %s695 = int_to_ptr.vmem [resolvable:$true] %s694
      %s696 = sshll.u32 %s3, 4
      %s697 = int_to_ptr.hbm [resolvable:$true] %s696
      %702 = dma.vmem_to_hbm [thread:$0]  %s695, 256, %s697, [#allocation5], 128, 128, 8
    $region17: #{tpu_custom_call.1} parent=1 // pred_fallthru
      _
    // Predicated region
    $region18: #{tpu_custom_call.1} parent=1 // pred_check
      _
    $region19: #{tpu_custom_call.1} parent=1 // pred_check_branch
      %704 = sbr.rel (0) target = $region21
    $region20: #{tpu_custom_call.1} parent=1 // pred_region
      %706 = dma.done [#allocation3], 256
    $region21: #{tpu_custom_call.1} parent=1 // pred_fallthru
      _
    // Predicated region
    $region22: #{tpu_custom_call.1} parent=1 // pred_check
      _
    $region23: #{tpu_custom_call.1} parent=1 // pred_check_branch
      %708 = sbr.rel (0) target = $region25
    $region24: #{tpu_custom_call.1} parent=1 // pred_region
      %710 = dma.done [#allocation5], 256
    $region25: #{tpu_custom_call.1} parent=1 // pred_fallthru
      _
    %711 = vsyncpa [#allocation3], 1
    %712 = vsyncpa [#allocation5], 1

</llo_original>
